<compile_context>
chip_gen: v7x
topology: tpu7x:2x2x1
jax: 0.10.0
libtpu: 0.0.40
codegen_flags: <defaults>
</compile_context>

<pallas_src>
import functools
import math

import jax
import jax.numpy as jnp
from jax import lax
from jax.experimental import pallas as pl
from jax.experimental.pallas import tpu as pltpu


_LOG_FLOOR = math.log(1e-7)  # clamp(min=1e-7) folded into a log-space max()


def _ngce_nce_kernel(pred_ref, labels_ref, out_ref, *,
                     num_classes, q, alpha, beta, total_n):
    """One grid step: tile of rows -> one (8, 128) block holding the tile's partial sum."""
    i = pl.program_id(0)

    x = pred_ref[...].astype(jnp.float32)        # (tile_n, C); upcasts bf16 inputs
    labels = labels_ref[...]                     # (tile_n, 1) int32
    tn, c = x.shape

    # Stable log-softmax: one exp per element, one log per row.
    m = jnp.max(x, axis=1, keepdims=True)
    lse = m + jnp.log(jnp.sum(jnp.exp(x - m), axis=1, keepdims=True))
    logp = x - lse                               # (tile_n, C)

    # one-hot via 2-D iota compared against the label column
    class_ids = lax.broadcasted_iota(jnp.int32, (tn, c), 1)
    onehot = class_ids == labels
    logp_label = jnp.sum(jnp.where(onehot, logp, 0.0), axis=1, keepdims=True)  # (tile_n, 1)

    # ---- NGCE in log space: clip(p, 1e-7, 1)**q == exp(q * max(logp, log 1e-7)) ----
    pq = jnp.exp(q * jnp.maximum(logp, _LOG_FLOOR))
    sum_pq = jnp.sum(pq, axis=1, keepdims=True)
    picked_q = jnp.exp(q * jnp.maximum(logp_label, _LOG_FLOOR))
    ngce = (1.0 - picked_q) / (jnp.float32(num_classes) - sum_pq)

    # ---- NCE: (-sum(onehot*logp)) / (-sum(logp)) ----
    nce = logp_label / jnp.sum(logp, axis=1, keepdims=True)

    per_row = alpha * ngce + beta * nce          # (tile_n, 1)

    # Mask rows that only exist because of padding N up to a multiple of tile_n.
    row_ids = i * tn + lax.broadcasted_iota(jnp.int32, (tn, 1), 0)
    per_row = jnp.where(row_ids < total_n, per_row, 0.0)

    tile_sum = jnp.sum(per_row)

    # Lane-dense, unmasked (8, 128) store; partial sum lives at [0, 0], zeros elsewhere.
    row = lax.broadcasted_iota(jnp.int32, (8, 128), 0)
    lane = lax.broadcasted_iota(jnp.int32, (8, 128), 1)
    out_ref[...] = jnp.where((row == 0) & (lane == 0), tile_sum, jnp.float32(0.0))


def ngce_nce_loss(pred, labels, num_classes, alpha=1.0, beta=1.0, q=0.7, tile_n=None):
    """pred: (N, C) float32/bfloat16, labels: (N,) int -> scalar float32 loss."""
    n, c = pred.shape
    assert c == num_classes

    if tile_n is None:
        # Double-buffered VMEM per row: C*4 bytes (pred) + 128*4 bytes (the
        # (tile_n, 1) int32 label block pads its lane dim to 128).  Keep the
        # total under ~16 MiB so it fits every generation's scoped default.
        budget = 16 * 1024 * 1024
        tile_n = min(4096, budget // (8 * (c + 128)), ((n + 7) // 8) * 8)
    tile_n = max(8, (tile_n // 8) * 8)

    n_pad = ((n + tile_n - 1) // tile_n) * tile_n
    num_tiles = n_pad // tile_n

    labels_col = labels.astype(jnp.int32).reshape(n, 1)
    pred_p = pred
    if n_pad != n:
        pred_p = jnp.pad(pred, ((0, n_pad - n), (0, 0)))
        labels_col = jnp.pad(labels_col, ((0, n_pad - n), (0, 0)))

    kernel = functools.partial(
        _ngce_nce_kernel,
        num_classes=num_classes,
        q=float(q),
        alpha=float(alpha),
        beta=float(beta),
        total_n=n,
    )

    partials = pl.pallas_call(
        kernel,
        out_shape=jax.ShapeDtypeStruct((num_tiles * 8, 128), jnp.float32),
        grid=(num_tiles,),
        in_specs=[
            pl.BlockSpec((tile_n, c), lambda i: (i, 0)),
            pl.BlockSpec((tile_n, 1), lambda i: (i, 0)),
        ],
        out_specs=pl.BlockSpec((8, 128), lambda i: (i, 0)),
        compiler_params=pltpu.CompilerParams(
            dimension_semantics=("parallel",),
            vmem_limit_bytes=32 * 1024 * 1024,
        ),
    )(pred_p, labels_col)

    # Tiny final reduction (num_tiles live values) + mean outside the kernel.
    return jnp.sum(partials) / jnp.float32(n)


def ngce_nce_loss_ref(pred, labels, num_classes, alpha=1.0, beta=1.0, q=0.7):
    x = pred.astype(jnp.float32)
    logp = jax.nn.log_softmax(x, axis=1)
    p = jnp.clip(jnp.exp(logp), 1e-7, 1.0)
    onehot = jax.nn.one_hot(labels, num_classes, dtype=jnp.float32)
    num = 1.0 - jnp.power(jnp.sum(onehot * p, axis=1), q)
    den = num_classes - jnp.sum(jnp.power(p, q), axis=1)
    ngce = num / den
    nce = jnp.sum(onehot * logp, axis=1) / jnp.sum(logp, axis=1)
    return alpha * jnp.mean(ngce) + beta * jnp.mean(nce)


if __name__ == "__main__":
    key = jax.random.PRNGKey(0)
    k1, k2, k3, k4 = jax.random.split(key, 4)

    # Case 1: small ragged batch (exercises pad + in-kernel row mask), f32 logits.
    n1, c1 = 50, 32
    pred1 = jax.random.normal(k1, (n1, c1), dtype=jnp.float32)
    lab1 = jax.random.randint(k2, (n1,), 0, c1, dtype=jnp.int32)
    got1 = jax.block_until_ready(ngce_nce_loss(pred1, lab1, c1, alpha=0.5, beta=1.5, q=0.7))
    ref1 = jax.block_until_ready(ngce_nce_loss_ref(pred1, lab1, c1, alpha=0.5, beta=1.5, q=0.7))
    assert jnp.allclose(got1, ref1, rtol=2e-5, atol=1e-6), (got1, ref1)

    # Case 2: bf16 logits, multiple tiles, parallel grid, C=10.
    n2, c2 = 256, 10
    pred2 = jax.random.normal(k3, (n2, c2), dtype=jnp.float32).astype(jnp.bfloat16)
    lab2 = jax.random.randint(k4, (n2,), 0, c2, dtype=jnp.int32)
    got2 = jax.block_until_ready(ngce_nce_loss(pred2, lab2, c2, alpha=1.0, beta=1.0, q=0.7, tile_n=64))
    ref2 = jax.block_until_ready(ngce_nce_loss_ref(pred2, lab2, c2, alpha=1.0, beta=1.0, q=0.7))
    assert jnp.allclose(got2, ref2, rtol=2e-5, atol=1e-6), (got2, ref2)

    print("KERNEL_OK")
</pallas_src>

<mosaic_0001>
module attributes {stable_mosaic.version = 11 : i64} {
  func.func @_ngce_nce_kernel(%arg0: i32, %arg1: memref<56x32xf32, #tpu.memory_space<vmem>>, %arg2: memref<56x1xi32, #tpu.memory_space<vmem>>, %arg3: memref<8x128xf32, #tpu.memory_space<vmem>>) attributes {dimension_semantics = [#tpu.dimension_semantics<parallel>], iteration_bounds = array<i64: 1>, scalar_prefetch = 0 : i64, scratch_operands = 0 : i64, tpu.core_type = #tpu.core_type<tc>, window_params = [{transform_indices = @transform_0, window_bounds = array<i64: 56, 32>}, {transform_indices = @transform_1, window_bounds = array<i64: 56, 1>}, {transform_indices = @transform_2, window_bounds = array<i64: 8, 128>}]} {
    %c0 = arith.constant 0 : index
    %c0_0 = arith.constant 0 : index
    %0 = vector.load %arg1[%c0, %c0_0] : memref<56x32xf32, #tpu.memory_space<vmem>>, vector<56x32xf32>
    %c0_1 = arith.constant 0 : index
    %c0_2 = arith.constant 0 : index
    %1 = vector.load %arg2[%c0_1, %c0_2] : memref<56x1xi32, #tpu.memory_space<vmem>>, vector<56x1xi32>
    %cst = arith.constant dense<0xFF800000> : vector<56xf32>
    %2 = vector.multi_reduction <maximumf>, %0, %cst [1] : vector<56x32xf32> to vector<56xf32>
    %3 = vector.shape_cast %2 : vector<56xf32> to vector<56x1xf32>
    %4 = vector.broadcast %3 : vector<56x1xf32> to vector<56x32xf32>
    %5 = arith.subf %0, %4 : vector<56x32xf32>
    %6 = math.exp %5 : vector<56x32xf32>
    %cst_3 = arith.constant dense<0.000000e+00> : vector<56xf32>
    %7 = vector.multi_reduction <add>, %6, %cst_3 [1] : vector<56x32xf32> to vector<56xf32>
    %8 = vector.shape_cast %7 : vector<56xf32> to vector<56x1xf32>
    %9 = math.log %8 : vector<56x1xf32>
    %10 = arith.addf %3, %9 : vector<56x1xf32>
    %11 = vector.broadcast %10 : vector<56x1xf32> to vector<56x32xf32>
    %12 = arith.subf %0, %11 : vector<56x32xf32>
    %13 = tpu.iota {dimensions = array<i32: 1>} : vector<56x32xi32>
    %14 = vector.broadcast %1 : vector<56x1xi32> to vector<56x32xi32>
    %15 = arith.cmpi eq, %13, %14 : vector<56x32xi32>
    %cst_4 = arith.constant 0.000000e+00 : f32
    %16 = vector.broadcast %cst_4 : f32 to vector<56x32xf32>
    %17 = arith.select %15, %12, %16 : vector<56x32xi1>, vector<56x32xf32>
    %cst_5 = arith.constant dense<0.000000e+00> : vector<56xf32>
    %18 = vector.multi_reduction <add>, %17, %cst_5 [1] : vector<56x32xf32> to vector<56xf32>
    %19 = vector.shape_cast %18 : vector<56xf32> to vector<56x1xf32>
    %cst_6 = arith.constant -16.1180954 : f32
    %20 = vector.broadcast %cst_6 : f32 to vector<56x32xf32>
    %21 = arith.maximumf %12, %20 : vector<56x32xf32>
    %cst_7 = arith.constant 0.699999988 : f32
    %22 = vector.broadcast %cst_7 : f32 to vector<56x32xf32>
    %23 = arith.mulf %22, %21 : vector<56x32xf32>
    %24 = math.exp %23 : vector<56x32xf32>
    %cst_8 = arith.constant dense<0.000000e+00> : vector<56xf32>
    %25 = vector.multi_reduction <add>, %24, %cst_8 [1] : vector<56x32xf32> to vector<56xf32>
    %26 = vector.shape_cast %25 : vector<56xf32> to vector<56x1xf32>
    %cst_9 = arith.constant -16.1180954 : f32
    %27 = vector.broadcast %cst_9 : f32 to vector<56x1xf32>
    %28 = arith.maximumf %19, %27 : vector<56x1xf32>
    %cst_10 = arith.constant 0.699999988 : f32
    %29 = vector.broadcast %cst_10 : f32 to vector<56x1xf32>
    %30 = arith.mulf %29, %28 : vector<56x1xf32>
    %31 = math.exp %30 : vector<56x1xf32>
    %cst_11 = arith.constant 1.000000e+00 : f32
    %32 = vector.broadcast %cst_11 : f32 to vector<56x1xf32>
    %33 = arith.subf %32, %31 : vector<56x1xf32>
    %cst_12 = arith.constant 3.200000e+01 : f32
    %34 = vector.broadcast %cst_12 : f32 to vector<56x1xf32>
    %35 = arith.subf %34, %26 : vector<56x1xf32>
    %36 = arith.divf %33, %35 : vector<56x1xf32>
    %cst_13 = arith.constant dense<0.000000e+00> : vector<56xf32>
    %37 = vector.multi_reduction <add>, %12, %cst_13 [1] : vector<56x32xf32> to vector<56xf32>
    %38 = vector.shape_cast %37 : vector<56xf32> to vector<56x1xf32>
    %39 = arith.divf %19, %38 : vector<56x1xf32>
    %cst_14 = arith.constant 5.000000e-01 : f32
    %40 = vector.broadcast %cst_14 : f32 to vector<56x1xf32>
    %41 = arith.mulf %40, %36 : vector<56x1xf32>
    %cst_15 = arith.constant 1.500000e+00 : f32
    %42 = vector.broadcast %cst_15 : f32 to vector<56x1xf32>
    %43 = arith.mulf %42, %39 : vector<56x1xf32>
    %44 = arith.addf %41, %43 : vector<56x1xf32>
    %c56_i32 = arith.constant 56 : i32
    %45 = arith.muli %arg0, %c56_i32 : i32
    %46 = tpu.iota {dimensions = array<i32: 0>} : vector<56x1xi32>
    %47 = vector.broadcast %45 : i32 to vector<56x1xi32>
    %48 = arith.addi %47, %46 : vector<56x1xi32>
    %c50_i32 = arith.constant 50 : i32
    %49 = vector.broadcast %c50_i32 : i32 to vector<56x1xi32>
    %50 = arith.cmpi slt, %48, %49 : vector<56x1xi32>
    %cst_16 = arith.constant 0.000000e+00 : f32
    %51 = vector.broadcast %cst_16 : f32 to vector<56x1xf32>
    %52 = arith.select %50, %44, %51 : vector<56x1xi1>, vector<56x1xf32>
    %53 = vector.shape_cast %52 : vector<56x1xf32> to vector<1x56x1xf32>
    %cst_17 = arith.constant dense<0.000000e+00> : vector<1xf32>
    %54 = vector.multi_reduction <add>, %53, %cst_17 [1, 2] : vector<1x56x1xf32> to vector<1xf32>
    %55 = vector.shape_cast %54 : vector<1xf32> to vector<1x1x1xf32>
    %56 = vector.extract %55[0, 0, 0] : f32 from vector<1x1x1xf32>
    %57 = tpu.iota {dimensions = array<i32: 0>} : vector<8x128xi32>
    %58 = tpu.iota {dimensions = array<i32: 1>} : vector<8x128xi32>
    %c0_i32 = arith.constant 0 : i32
    %59 = vector.broadcast %c0_i32 : i32 to vector<8x128xi32>
    %60 = arith.cmpi eq, %57, %59 : vector<8x128xi32>
    %c0_i32_18 = arith.constant 0 : i32
    %61 = vector.broadcast %c0_i32_18 : i32 to vector<8x128xi32>
    %62 = arith.cmpi eq, %58, %61 : vector<8x128xi32>
    %63 = arith.andi %60, %62 : vector<8x128xi1>
    %cst_19 = arith.constant 0.000000e+00 : f32
    %64 = vector.broadcast %56 : f32 to vector<8x128xf32>
    %65 = vector.broadcast %cst_19 : f32 to vector<8x128xf32>
    %66 = arith.select %63, %64, %65 : vector<8x128xi1>, vector<8x128xf32>
    %c0_20 = arith.constant 0 : index
    %c0_21 = arith.constant 0 : index
    %67 = vector.load %arg3[%c0_20, %c0_21] : memref<8x128xf32, #tpu.memory_space<vmem>>, vector<8x128xf32>
    tpu.vector_store %arg3[%c0_20, %c0_21], %66 {strides = array<i32>} : memref<8x128xf32, #tpu.memory_space<vmem>>, vector<8x128xf32>,
    return
  }
  func.func @transform_0(%arg0: i32) -> (i32, i32) {
    %c0_i32 = arith.constant 0 : i32
    %c0_i32_0 = arith.constant 0 : i32
    return %arg0, %c0_i32 : i32, i32
  }
  func.func @transform_1(%arg0: i32) -> (i32, i32) {
    %c0_i32 = arith.constant 0 : i32
    %c0_i32_0 = arith.constant 0 : i32
    return %arg0, %c0_i32 : i32, i32
  }
  func.func @transform_2(%arg0: i32) -> (i32, i32) {
    %c0_i32 = arith.constant 0 : i32
    %c0_i32_0 = arith.constant 0 : i32
    return %arg0, %c0_i32 : i32, i32
  }
}

</mosaic_0001>

<llo_original>
// kernel: tpu_custom_call.1
$region0: #{tpu_custom_call.1}
  #allocation0 [shape = 'u32[]', space=smem, size = 0x4, offset = 0x4, fixed_abs, tag = 'smem constant byte address 0x4 - core index']
  #allocation1 [shape = 'u32[144,128]{1,0:T(1,128)}', space=vmem, size = 0x12000, scoped, tag = 'internal scratch']
  %s0 = inlined_call_operand.vmem [shape: f32[56,32], index: 0, kind: input, shape index: {}]
  %s1 = inlined_call_operand.vmem [shape: s32[56,1], index: 1, kind: input, shape index: {}]
  %s2 = inlined_call_operand.hbm [shape: f32[8,128], index: 2, kind: output, shape index: {}]
  %s3 = sld [smem:[#allocation0]]
  $region18: #{tpu_custom_call.1} parent=0
    _
  %s5 = ssub.s32 1, %s3
  %s6 = scalar_select 0, %s5, %s3
  $region1: #{tpu_custom_call.1} parent=0
    #allocation2 [shape = 'u8[4096]{0}', space=vmem, size = 0x1000, scoped, tag = 'output window, operand 0, single buffered']
    #allocation3 [shape = 's32[1]{0}', space=sflag, size = 0x4, scoped, tag = 'scoped memory for tpu_custom_call.1']
    %7 = vsyncpa [#allocation3], 0
    // Predicated region
    $region2: #{tpu_custom_call.1} parent=1 // pred_check
      _
    $region3: #{tpu_custom_call.1} parent=1 // pred_check_branch
      %9 = sbr.rel (0) target = $region5
    $region4: #{tpu_custom_call.1} parent=1 // pred_region
      _
    $region5: #{tpu_custom_call.1} parent=1 // pred_fallthru
      _
    // Predicated region
    $region6: #{tpu_custom_call.1} parent=1 // pred_check
      _
    $region7: #{tpu_custom_call.1} parent=1 // pred_check_branch
      %11 = sbr.rel (0) target = $region9
    $region8: #{tpu_custom_call.1} parent=1 // pred_region
      _
    $region9: #{tpu_custom_call.1} parent=1 // pred_fallthru
      _
    %v12 = vld [vmem:[%s0] sm:$0xff]
    %v13 = vld [vmem:[%s0 + $0x8] sm:$0xff]
    %v14 = vld [vmem:[%s0 + $0x10] sm:$0xff]
    %v15 = vld [vmem:[%s0 + $0x18] sm:$0xff]
    %v16 = vld [vmem:[%s0 + $0x20] sm:$0xff]
    %v17 = vld [vmem:[%s0 + $0x28] sm:$0xff]
    %v18 = vld [vmem:[%s0 + $0x30] sm:$0xff]
    %v19 = vld [vmem:[%s1] sm:$0xff]
    %v20 = vld [vmem:[%s1 + $0x8] sm:$0xff]
    %v21 = vld [vmem:[%s1 + $0x10] sm:$0xff]
    %v22 = vld [vmem:[%s1 + $0x18] sm:$0xff]
    %v23 = vld [vmem:[%s1 + $0x20] sm:$0xff]
    %v24 = vld [vmem:[%s1 + $0x28] sm:$0xff]
    %v25 = vld [vmem:[%s1 + $0x30] sm:$0xff]
    %vm26 = vcmask 261120
    %v27 = vsel %vm26, %v12, -inf
    %28 = vmax.xlane.f32.xlu0 %v27
    %v29 = vpop.xlane.xlu0 %28
    %v30 = vsel %vm26, %v13, -inf
    %31 = vmax.xlane.f32.xlu0 %v30
    %v32 = vpop.xlane.xlu0 %31
    %v33 = vsel %vm26, %v14, -inf
    %34 = vmax.xlane.f32.xlu0 %v33
    %v35 = vpop.xlane.xlu0 %34
    %v36 = vsel %vm26, %v15, -inf
    %37 = vmax.xlane.f32.xlu0 %v36
    %v38 = vpop.xlane.xlu0 %37
    %v39 = vsel %vm26, %v16, -inf
    %40 = vmax.xlane.f32.xlu0 %v39
    %v41 = vpop.xlane.xlu0 %40
    %v42 = vsel %vm26, %v17, -inf
    %43 = vmax.xlane.f32.xlu0 %v42
    %v44 = vpop.xlane.xlu0 %43
    %v45 = vsel %vm26, %v18, -inf
    %46 = vmax.xlane.f32.xlu0 %v45
    %v47 = vpop.xlane.xlu0 %46
    %v48 = vsub.f32 %v12, %v29
    %v49 = vsub.f32 %v13, %v32
    %v50 = vsub.f32 %v14, %v35
    %v51 = vsub.f32 %v15, %v38
    %v52 = vsub.f32 %v16, %v41
    %v53 = vsub.f32 %v17, %v44
    %v54 = vsub.f32 %v18, %v47
    %v55 = vmul.f32 %v48, 1.442695
    %v56 = vpow.pop %v55
    %v57 = vmul.f32 %v49, 1.442695
    %v58 = vpow.pop %v57
    %v59 = vmul.f32 %v50, 1.442695
    %v60 = vpow.pop %v59
    %v61 = vmul.f32 %v51, 1.442695
    %v62 = vpow.pop %v61
    %v63 = vmul.f32 %v52, 1.442695
    %v64 = vpow.pop %v63
    %v65 = vmul.f32 %v53, 1.442695
    %v66 = vpow.pop %v65
    %v67 = vmul.f32 %v54, 1.442695
    %v68 = vpow.pop %v67
    %v69 = vsel %vm26, %v56, 0.0
    %70 = vadd.xlane.f32.xlu0 %v69
    %v71 = vpop.xlane.xlu0 %70
    %v72 = vsel %vm26, %v58, 0.0
    %73 = vadd.xlane.f32.xlu0 %v72
    %v74 = vpop.xlane.xlu0 %73
    %v75 = vsel %vm26, %v60, 0.0
    %76 = vadd.xlane.f32.xlu0 %v75
    %v77 = vpop.xlane.xlu0 %76
    %v78 = vsel %vm26, %v62, 0.0
    %79 = vadd.xlane.f32.xlu0 %v78
    %v80 = vpop.xlane.xlu0 %79
    %v81 = vsel %vm26, %v64, 0.0
    %82 = vadd.xlane.f32.xlu0 %v81
    %v83 = vpop.xlane.xlu0 %82
    %v84 = vsel %vm26, %v66, 0.0
    %85 = vadd.xlane.f32.xlu0 %v84
    %v86 = vpop.xlane.xlu0 %85
    %v87 = vsel %vm26, %v68, 0.0
    %88 = vadd.xlane.f32.xlu0 %v87
    %v89 = vpop.xlane.xlu0 %88
    %v90 = vlog2.pop %v71
    %v91 = vmul.f32 %v90, 0.6931472
    %v92 = vlog2.pop %v74
    %v93 = vmul.f32 %v92, 0.6931472
    %v94 = vlog2.pop %v77
    %v95 = vmul.f32 %v94, 0.6931472
    %v96 = vlog2.pop %v80
    %v97 = vmul.f32 %v96, 0.6931472
    %v98 = vlog2.pop %v83
    %v99 = vmul.f32 %v98, 0.6931472
    %v100 = vlog2.pop %v86
    %v101 = vmul.f32 %v100, 0.6931472
    %v102 = vlog2.pop %v89
    %v103 = vmul.f32 %v102, 0.6931472
    %v104 = vadd.f32 %v29, %v91
    %v105 = vadd.f32 %v32, %v93
    %v106 = vadd.f32 %v35, %v95
    %v107 = vadd.f32 %v38, %v97
    %v108 = vadd.f32 %v41, %v99
    %v109 = vadd.f32 %v44, %v101
    %v110 = vadd.f32 %v47, %v103
    %v111 = vsub.f32 %v12, %v104
    %v112 = vsub.f32 %v13, %v105
    %v113 = vsub.f32 %v14, %v106
    %v114 = vsub.f32 %v15, %v107
    %v115 = vsub.f32 %v16, %v108
    %v116 = vsub.f32 %v17, %v109
    %v117 = vsub.f32 %v18, %v110
    %v118 = vlaneseq
    %v119 = vand.u32 %v118, 127
    %120 = vset.pattern.permute.xlu0 0
    %121 = vperm.xlu0 %120, %v19
    %v122 = vpop.permute.xlu0 %121
    %123 = vset.pattern.permute.xlu0 0
    %124 = vperm.xlu0 %123, %v20
    %v125 = vpop.permute.xlu0 %124
    %126 = vset.pattern.permute.xlu0 0
    %127 = vperm.xlu0 %126, %v21
    %v128 = vpop.permute.xlu0 %127
    %129 = vset.pattern.permute.xlu0 0
    %130 = vperm.xlu0 %129, %v22
    %v131 = vpop.permute.xlu0 %130
    %132 = vset.pattern.permute.xlu0 0
    %133 = vperm.xlu0 %132, %v23
    %v134 = vpop.permute.xlu0 %133
    %135 = vset.pattern.permute.xlu0 0
    %136 = vperm.xlu0 %135, %v24
    %v137 = vpop.permute.xlu0 %136
    %138 = vset.pattern.permute.xlu0 0
    %139 = vperm.xlu0 %138, %v25
    %v140 = vpop.permute.xlu0 %139
    %vm141 = vcmp.eq.s32.totalorder %v119, %v122
    %vm142 = vcmp.eq.s32.totalorder %v119, %v125
    %vm143 = vcmp.eq.s32.totalorder %v119, %v128
    %vm144 = vcmp.eq.s32.totalorder %v119, %v131
    %vm145 = vcmp.eq.s32.totalorder %v119, %v134
    %vm146 = vcmp.eq.s32.totalorder %v119, %v137
    %vm147 = vcmp.eq.s32.totalorder %v119, %v140
    %v148 = vsel %vm141, %v111, 0.0
    %v149 = vsel %vm142, %v112, 0.0
    %v150 = vsel %vm143, %v113, 0.0
    %v151 = vsel %vm144, %v114, 0.0
    %v152 = vsel %vm145, %v115, 0.0
    %v153 = vsel %vm146, %v116, 0.0
    %v154 = vsel %vm147, %v117, 0.0
    %v155 = vsel %vm26, %v148, 0.0
    %156 = vadd.xlane.f32.xlu0 %v155
    %v157 = vpop.xlane.xlu0 %156
    %v158 = vsel %vm26, %v149, 0.0
    %159 = vadd.xlane.f32.xlu0 %v158
    %v160 = vpop.xlane.xlu0 %159
    %v161 = vsel %vm26, %v150, 0.0
    %162 = vadd.xlane.f32.xlu0 %v161
    %v163 = vpop.xlane.xlu0 %162
    %v164 = vsel %vm26, %v151, 0.0
    %165 = vadd.xlane.f32.xlu0 %v164
    %v166 = vpop.xlane.xlu0 %165
    %v167 = vsel %vm26, %v152, 0.0
    %168 = vadd.xlane.f32.xlu0 %v167
    %v169 = vpop.xlane.xlu0 %168
    %v170 = vsel %vm26, %v153, 0.0
    %171 = vadd.xlane.f32.xlu0 %v170
    %v172 = vpop.xlane.xlu0 %171
    %v173 = vsel %vm26, %v154, 0.0
    %174 = vadd.xlane.f32.xlu0 %v173
    %v175 = vpop.xlane.xlu0 %174
    %v176 = vmax.f32 %v111, -16.118095
    %v177 = vmax.f32 %v112, -16.118095
    %v178 = vmax.f32 %v113, -16.118095
    %v179 = vmax.f32 %v114, -16.118095
    %v180 = vmax.f32 %v115, -16.118095
    %v181 = vmax.f32 %v116, -16.118095
    %v182 = vmax.f32 %v117, -16.118095
    %v183 = vmul.f32 %v176, 0.7
    %v184 = vmul.f32 %v177, 0.7
    %v185 = vmul.f32 %v178, 0.7
    %v186 = vmul.f32 %v179, 0.7
    %v187 = vmul.f32 %v180, 0.7
    %v188 = vmul.f32 %v181, 0.7
    %v189 = vmul.f32 %v182, 0.7
    %v190 = vmul.f32 %v183, 1.442695
    %v191 = vpow.pop %v190
    %v192 = vmul.f32 %v184, 1.442695
    %v193 = vpow.pop %v192
    %v194 = vmul.f32 %v185, 1.442695
    %v195 = vpow.pop %v194
    %v196 = vmul.f32 %v186, 1.442695
    %v197 = vpow.pop %v196
    %v198 = vmul.f32 %v187, 1.442695
    %v199 = vpow.pop %v198
    %v200 = vmul.f32 %v188, 1.442695
    %v201 = vpow.pop %v200
    %v202 = vmul.f32 %v189, 1.442695
    %v203 = vpow.pop %v202
    %v204 = vsel %vm26, %v191, 0.0
    %205 = vadd.xlane.f32.xlu0 %v204
    %v206 = vpop.xlane.xlu0 %205
    %v207 = vsel %vm26, %v193, 0.0
    %208 = vadd.xlane.f32.xlu0 %v207
    %v209 = vpop.xlane.xlu0 %208
    %v210 = vsel %vm26, %v195, 0.0
    %211 = vadd.xlane.f32.xlu0 %v210
    %v212 = vpop.xlane.xlu0 %211
    %v213 = vsel %vm26, %v197, 0.0
    %214 = vadd.xlane.f32.xlu0 %v213
    %v215 = vpop.xlane.xlu0 %214
    %v216 = vsel %vm26, %v199, 0.0
    %217 = vadd.xlane.f32.xlu0 %v216
    %v218 = vpop.xlane.xlu0 %217
    %v219 = vsel %vm26, %v201, 0.0
    %220 = vadd.xlane.f32.xlu0 %v219
    %v221 = vpop.xlane.xlu0 %220
    %v222 = vsel %vm26, %v203, 0.0
    %223 = vadd.xlane.f32.xlu0 %v222
    %v224 = vpop.xlane.xlu0 %223
    %v225 = vmax.f32 %v157, -16.118095
    %v226 = vmax.f32 %v160, -16.118095
    %v227 = vmax.f32 %v163, -16.118095
    %v228 = vmax.f32 %v166, -16.118095
    %v229 = vmax.f32 %v169, -16.118095
    %v230 = vmax.f32 %v172, -16.118095
    %v231 = vmax.f32 %v175, -16.118095
    %v232 = vmul.f32 %v225, 0.7
    %v233 = vmul.f32 %v226, 0.7
    %v234 = vmul.f32 %v227, 0.7
    %v235 = vmul.f32 %v228, 0.7
    %v236 = vmul.f32 %v229, 0.7
    %v237 = vmul.f32 %v230, 0.7
    %v238 = vmul.f32 %v231, 0.7
    %v239 = vmul.f32 %v232, 1.442695
    %v240 = vpow.pop %v239
    %v241 = vmul.f32 %v233, 1.442695
    %v242 = vpow.pop %v241
    %v243 = vmul.f32 %v234, 1.442695
    %v244 = vpow.pop %v243
    %v245 = vmul.f32 %v235, 1.442695
    %v246 = vpow.pop %v245
    %v247 = vmul.f32 %v236, 1.442695
    %v248 = vpow.pop %v247
    %v249 = vmul.f32 %v237, 1.442695
    %v250 = vpow.pop %v249
    %v251 = vmul.f32 %v238, 1.442695
    %v252 = vpow.pop %v251
    %v253 = vsub.f32 1.0, %v240
    %v254 = vsub.f32 1.0, %v242
    %v255 = vsub.f32 1.0, %v244
    %v256 = vsub.f32 1.0, %v246
    %v257 = vsub.f32 1.0, %v248
    %v258 = vsub.f32 1.0, %v250
    %v259 = vsub.f32 1.0, %v252
    %v260 = vsub.f32 32.0, %v206
    %v261 = vsub.f32 32.0, %v209
    %v262 = vsub.f32 32.0, %v212
    %v263 = vsub.f32 32.0, %v215
    %v264 = vsub.f32 32.0, %v218
    %v265 = vsub.f32 32.0, %v221
    %v266 = vsub.f32 32.0, %v224
    %v267 = vrcp.pop %v260
    %v268 = vmul.f32 %v253, %v267
    %v269 = vrcp.pop %v261
    %v270 = vmul.f32 %v254, %v269
    %v271 = vrcp.pop %v262
    %v272 = vmul.f32 %v255, %v271
    %v273 = vrcp.pop %v263
    %v274 = vmul.f32 %v256, %v273
    %v275 = vrcp.pop %v264
    %v276 = vmul.f32 %v257, %v275
    %v277 = vrcp.pop %v265
    %v278 = vmul.f32 %v258, %v277
    %v279 = vrcp.pop %v266
    %v280 = vmul.f32 %v259, %v279
    %v281 = vsel %vm26, %v111, 0.0
    %282 = vadd.xlane.f32.xlu0 %v281
    %v283 = vpop.xlane.xlu0 %282
    %v284 = vsel %vm26, %v112, 0.0
    %285 = vadd.xlane.f32.xlu0 %v284
    %v286 = vpop.xlane.xlu0 %285
    %v287 = vsel %vm26, %v113, 0.0
    %288 = vadd.xlane.f32.xlu0 %v287
    %v289 = vpop.xlane.xlu0 %288
    %v290 = vsel %vm26, %v114, 0.0
    %291 = vadd.xlane.f32.xlu0 %v290
    %v292 = vpop.xlane.xlu0 %291
    %v293 = vsel %vm26, %v115, 0.0
    %294 = vadd.xlane.f32.xlu0 %v293
    %v295 = vpop.xlane.xlu0 %294
    %v296 = vsel %vm26, %v116, 0.0
    %297 = vadd.xlane.f32.xlu0 %v296
    %v298 = vpop.xlane.xlu0 %297
    %v299 = vsel %vm26, %v117, 0.0
    %300 = vadd.xlane.f32.xlu0 %v299
    %v301 = vpop.xlane.xlu0 %300
    %v302 = vrcp.pop %v283
    %v303 = vmul.f32 %v157, %v302
    %v304 = vrcp.pop %v286
    %v305 = vmul.f32 %v160, %v304
    %v306 = vrcp.pop %v289
    %v307 = vmul.f32 %v163, %v306
    %v308 = vrcp.pop %v292
    %v309 = vmul.f32 %v166, %v308
    %v310 = vrcp.pop %v295
    %v311 = vmul.f32 %v169, %v310
    %v312 = vrcp.pop %v298
    %v313 = vmul.f32 %v172, %v312
    %v314 = vrcp.pop %v301
    %v315 = vmul.f32 %v175, %v314
    %v316 = vmul.f32 %v268, 0.5
    %v317 = vmul.f32 %v270, 0.5
    %v318 = vmul.f32 %v272, 0.5
    %v319 = vmul.f32 %v274, 0.5
    %v320 = vmul.f32 %v276, 0.5
    %v321 = vmul.f32 %v278, 0.5
    %v322 = vmul.f32 %v280, 0.5
    %v323 = vmul.f32 %v303, 1.5
    %v324 = vmul.f32 %v305, 1.5
    %v325 = vmul.f32 %v307, 1.5
    %v326 = vmul.f32 %v309, 1.5
    %v327 = vmul.f32 %v311, 1.5
    %v328 = vmul.f32 %v313, 1.5
    %v329 = vmul.f32 %v315, 1.5
    %v330 = vadd.f32 %v316, %v323
    %v331 = vadd.f32 %v317, %v324
    %v332 = vadd.f32 %v318, %v325
    %v333 = vadd.f32 %v319, %v326
    %v334 = vadd.f32 %v320, %v327
    %v335 = vadd.f32 %v321, %v328
    %v336 = vadd.f32 %v322, %v329
    %s337 = smul.u32 0, 56
    %v338 = vlaneseq
    %v339 = vshrl.u32 %v338, 7
    %v340 = vadd.s32 %v339, 8
    %v341 = vadd.s32 %v339, 16
    %v342 = vadd.s32 %v339, 24
    %v343 = vadd.s32 %v339, 32
    %v344 = vadd.s32 %v339, 40
    %v345 = vadd.s32 %v339, 48
    %v346 = vstv %s337
    %v347 = vadd.s32 %v346, %v339
    %v348 = vadd.s32 %v346, %v340
    %v349 = vadd.s32 %v346, %v341
    %v350 = vadd.s32 %v346, %v342
    %v351 = vadd.s32 %v346, %v343
    %v352 = vadd.s32 %v346, %v344
    %v353 = vadd.s32 %v346, %v345
    %vm354 = vcmp.lt.s32.totalorder %v347, 50
    %vm355 = vcmp.lt.s32.totalorder %v348, 50
    %vm356 = vcmp.lt.s32.totalorder %v349, 50
    %vm357 = vcmp.lt.s32.totalorder %v350, 50
    %vm358 = vcmp.lt.s32.totalorder %v351, 50
    %vm359 = vcmp.lt.s32.totalorder %v352, 50
    %vm360 = vcmp.lt.s32.totalorder %v353, 50
    %v361 = vsel %vm354, %v330, 0.0
    %v362 = vsel %vm355, %v331, 0.0
    %v363 = vsel %vm356, %v332, 0.0
    %v364 = vsel %vm357, %v333, 0.0
    %v365 = vsel %vm358, %v334, 0.0
    %v366 = vsel %vm359, %v335, 0.0
    %v367 = vsel %vm360, %v336, 0.0
    %vm368 = vcmask 7168
    %v369 = vsel %vm368, %v361, 0.0
    %v370 = vsel %vm368, %v362, 0.0
    %v371 = vadd.f32 %v369, %v370
    %v372 = vsel %vm368, %v363, 0.0
    %v373 = vadd.f32 %v371, %v372
    %v374 = vsel %vm368, %v364, 0.0
    %v375 = vadd.f32 %v373, %v374
    %v376 = vsel %vm368, %v365, 0.0
    %v377 = vadd.f32 %v375, %v376
    %v378 = vsel %vm368, %v366, 0.0
    %v379 = vadd.f32 %v377, %v378
    %v380 = vsel %vm368, %v367, 0.0
    %v381 = vadd.f32 %v379, %v380
    %382 = vadd.xlane.f32.xlu0 %v381
    %v383 = vpop.xlane.xlu0 %382
    %v384 = vrot.slane %v383, 4
    %v385 = vadd.f32 %v383, %v384
    %v386 = vrot.slane %v385, 2
    %v387 = vadd.f32 %v385, %v386
    %v388 = vrot.slane %v387, 1
    %v389 = vadd.f32 %v387, %v388
    %s390 = vtos %v389
    %vm391 = vcmp.eq.s32.totalorder %v339, 0
    %vm392 = vcmp.eq.s32.totalorder %v119, 0
    %vm393 = vmand %vm391, %vm392
    %v394 = vstv %s390
    %v395 = vsel %vm393, %v394, 0.0
    %396 = vst [vmem:[#allocation2] sm:$0xff] %v395
    // Predicated region
    $region10: #{tpu_custom_call.1} parent=1 // pred_check
      _
    $region11: #{tpu_custom_call.1} parent=1 // pred_check_branch
      %398 = sbr.rel (0) target = $region13
    $region12: #{tpu_custom_call.1} parent=1 // pred_region
      %s400 = ssub.s32 128, 128
      %401 = vsyncadd [#allocation3], %s400
      %s403 = sshll.u32 [#allocation2], 4
      %s404 = int_to_ptr.vmem [resolvable:$true] %s403
      %406 = dma.vmem_to_hbm [thread:$0]  %s404, 128, %s2, [#allocation3]
    $region13: #{tpu_custom_call.1} parent=1 // pred_fallthru
      _
    // Predicated region
    $region14: #{tpu_custom_call.1} parent=1 // pred_check
      _
    $region15: #{tpu_custom_call.1} parent=1 // pred_check_branch
      %408 = sbr.rel (0) target = $region17
    $region16: #{tpu_custom_call.1} parent=1 // pred_region
      %409 = dma.done [#allocation3], 128
    $region17: #{tpu_custom_call.1} parent=1 // pred_fallthru
      _
    %410 = vsyncpa [#allocation3], 1

</llo_original>
